<compile_context>
chip_gen: v7x
topology: tpu7x:2x2x1
jax: 0.10.0
libtpu: 0.0.40
codegen_flags: <defaults>
</compile_context>

<pallas_src>
import jax
import jax.numpy as jnp
from jax.experimental import pallas as pl
from jax.experimental.pallas import tpu as pltpu

_LN_EPS = 1e-5
_GELU_C = 0.7978845608028654  # sqrt(2/pi)


def _round_up(x: int, m: int) -> int:
    return ((x + m - 1) // m) * m


def _ffn_ln_kernel(x_ref, w1_ref, b1_ref, w2_ref, b2_ref, gamma_ref, beta_ref, o_ref):
    # x_ref:  (tR, H)     one tile of flattened rows
    # w1_ref: (H, 4H)  b1_ref: (1, 4H)
    # w2_ref: (4H, H)  b2_ref: (1, H)
    # gamma_ref/beta_ref: (1, H)
    x = x_ref[...].astype(jnp.float32)

    # linear1 + GELU (tanh approximation)
    h = jnp.dot(x, w1_ref[...].astype(jnp.float32),
                preferred_element_type=jnp.float32) + b1_ref[...].astype(jnp.float32)
    h3 = h * h * h
    g = 0.5 * h * (1.0 + jnp.tanh(_GELU_C * (h + 0.044715 * h3)))

    # linear2 + residual
    y = jnp.dot(g, w2_ref[...].astype(jnp.float32),
                preferred_element_type=jnp.float32) + b2_ref[...].astype(jnp.float32)
    z = y + x

    # LayerNorm over the feature axis
    mean = jnp.mean(z, axis=-1, keepdims=True)
    zc = z - mean
    var = jnp.mean(zc * zc, axis=-1, keepdims=True)
    inv = jax.lax.rsqrt(var + _LN_EPS)
    out = zc * inv * gamma_ref[...].astype(jnp.float32) + beta_ref[...].astype(jnp.float32)

    o_ref[...] = out.astype(o_ref.dtype)


def enhanced_feature_block_forward(x, w1, b1, w2, b2, gamma, beta, *, row_tile=512):
    """x: (..., H).  w1: (H, 4H), b1: (4H,), w2: (4H, H), b2: (H,), gamma/beta: (H,)."""
    orig_shape = x.shape
    H = orig_shape[-1]
    H4 = 4 * H
    assert w1.shape == (H, H4) and w2.shape == (H4, H)

    x2 = x.reshape(-1, H)
    N = x2.shape[0]

    # Row tile: as large as row_tile (multiple of 8), padded N up to a tile multiple.
    tR = min(row_tile, _round_up(N, 8))
    Np = _round_up(N, tR)
    if Np != N:
        x2 = jnp.pad(x2, ((0, Np - N), (0, 0)))

    b1_2d = b1.reshape(1, H4)
    b2_2d = b2.reshape(1, H)
    gamma_2d = gamma.reshape(1, H)
    beta_2d = beta.reshape(1, H)

    grid = (Np // tR,)

    out = pl.pallas_call(
        _ffn_ln_kernel,
        out_shape=jax.ShapeDtypeStruct((Np, H), x.dtype),
        grid_spec=pltpu.PrefetchScalarGridSpec(
            num_scalar_prefetch=0,
            grid=grid,
            in_specs=[
                pl.BlockSpec((tR, H), lambda i: (i, 0)),    # x row tile
                pl.BlockSpec((H, H4), lambda i: (0, 0)),    # W1 (resident)
                pl.BlockSpec((1, H4), lambda i: (0, 0)),    # b1 (resident)
                pl.BlockSpec((H4, H), lambda i: (0, 0)),    # W2 (resident)
                pl.BlockSpec((1, H), lambda i: (0, 0)),     # b2 (resident)
                pl.BlockSpec((1, H), lambda i: (0, 0)),     # gamma (resident)
                pl.BlockSpec((1, H), lambda i: (0, 0)),     # beta (resident)
            ],
            out_specs=pl.BlockSpec((tR, H), lambda i: (i, 0)),
        ),
        compiler_params=pltpu.CompilerParams(
            dimension_semantics=("parallel",),
            vmem_limit_bytes=32 * 1024 * 1024,
        ),
    )(x2, w1, b1_2d, w2, b2_2d, gamma_2d, beta_2d)

    if Np != N:
        out = out[:N]
    return out.reshape(orig_shape)


def _reference(x, w1, b1, w2, b2, gamma, beta):
    h = x @ w1 + b1
    g = 0.5 * h * (1.0 + jnp.tanh(_GELU_C * (h + 0.044715 * h ** 3)))
    y = g @ w2 + b2
    z = y + x
    mean = z.mean(-1, keepdims=True)
    var = ((z - mean) ** 2).mean(-1, keepdims=True)
    return (z - mean) * jax.lax.rsqrt(var + _LN_EPS) * gamma + beta


if __name__ == "__main__":
    # Small shapes consistent with the module: (batch=2, seq=8, hidden=32)
    B, S, H = 2, 8, 32
    H4 = 4 * H

    key = jax.random.PRNGKey(0)
    k = jax.random.split(key, 5)
    x = jax.random.normal(k[0], (B, S, H), dtype=jnp.float32)
    w1 = jax.random.normal(k[1], (H, H4), dtype=jnp.float32) * 0.05
    b1 = jax.random.normal(k[2], (H4,), dtype=jnp.float32) * 0.05
    w2 = jax.random.normal(k[3], (H4, H), dtype=jnp.float32) * 0.05
    b2 = jax.random.normal(k[4], (H,), dtype=jnp.float32) * 0.05
    gamma = jnp.ones((H,), dtype=jnp.float32)   # nn.LayerNorm default init
    beta = jnp.zeros((H,), dtype=jnp.float32)

    out = enhanced_feature_block_forward(x, w1, b1, w2, b2, gamma, beta)
    out = jax.block_until_ready(out)

    ref = _reference(x, w1, b1, w2, b2, gamma, beta)
    assert out.shape == (B, S, H)
    # Loose tolerance covers MXU vs XLA f32-matmul precision differences.
    assert jnp.allclose(out, ref, atol=2e-2, rtol=2e-2), "mismatch vs reference"

    print("KERNEL_OK")
</pallas_src>

<mosaic_0001>
module attributes {stable_mosaic.version = 11 : i64} {
  func.func @_ffn_ln_kernel(%arg0: i32, %arg1: memref<16x32xf32, #tpu.memory_space<vmem>>, %arg2: memref<32x128xf32, #tpu.memory_space<vmem>>, %arg3: memref<1x128xf32, #tpu.memory_space<vmem>>, %arg4: memref<128x32xf32, #tpu.memory_space<vmem>>, %arg5: memref<1x32xf32, #tpu.memory_space<vmem>>, %arg6: memref<1x32xf32, #tpu.memory_space<vmem>>, %arg7: memref<1x32xf32, #tpu.memory_space<vmem>>, %arg8: memref<16x32xf32, #tpu.memory_space<vmem>>) attributes {dimension_semantics = [#tpu.dimension_semantics<parallel>], iteration_bounds = array<i64: 1>, scalar_prefetch = 0 : i64, scratch_operands = 0 : i64, tpu.core_type = #tpu.core_type<tc>, window_params = [{transform_indices = @transform_0, window_bounds = array<i64: 16, 32>}, {pipeline_mode = #tpu.pipeline_mode<synchronous>, transform_indices = @transform_1, window_bounds = array<i64: 32, 128>}, {pipeline_mode = #tpu.pipeline_mode<synchronous>, transform_indices = @transform_2, window_bounds = array<i64: 1, 128>}, {pipeline_mode = #tpu.pipeline_mode<synchronous>, transform_indices = @transform_3, window_bounds = array<i64: 128, 32>}, {pipeline_mode = #tpu.pipeline_mode<synchronous>, transform_indices = @transform_4, window_bounds = array<i64: 1, 32>}, {pipeline_mode = #tpu.pipeline_mode<synchronous>, transform_indices = @transform_5, window_bounds = array<i64: 1, 32>}, {pipeline_mode = #tpu.pipeline_mode<synchronous>, transform_indices = @transform_6, window_bounds = array<i64: 1, 32>}, {transform_indices = @transform_7, window_bounds = array<i64: 16, 32>}]} {
    %c0 = arith.constant 0 : index
    %c0_0 = arith.constant 0 : index
    %0 = vector.load %arg1[%c0, %c0_0] : memref<16x32xf32, #tpu.memory_space<vmem>>, vector<16x32xf32>
    %c0_1 = arith.constant 0 : index
    %c0_2 = arith.constant 0 : index
    %1 = vector.load %arg2[%c0_1, %c0_2] : memref<32x128xf32, #tpu.memory_space<vmem>>, vector<32x128xf32>
    %cst = arith.constant dense<0.000000e+00> : vector<16x128xf32>
    %2 = tpu.matmul %0, %1, %cst {dimension_numbers = #tpu.dot_dimension_numbers<[1], [0], [0], [1], [0, 0, 1, 1], [], []>} : vector<16x32xf32>, vector<32x128xf32>, vector<16x128xf32> -> vector<16x128xf32>
    %c0_3 = arith.constant 0 : index
    %c0_4 = arith.constant 0 : index
    %3 = vector.load %arg3[%c0_3, %c0_4] : memref<1x128xf32, #tpu.memory_space<vmem>>, vector<1x128xf32>
    %4 = vector.broadcast %3 : vector<1x128xf32> to vector<16x128xf32>
    %5 = arith.addf %2, %4 : vector<16x128xf32>
    %6 = arith.mulf %5, %5 : vector<16x128xf32>
    %7 = arith.mulf %6, %5 : vector<16x128xf32>
    %cst_5 = arith.constant 5.000000e-01 : f32
    %8 = vector.broadcast %cst_5 : f32 to vector<16x128xf32>
    %9 = arith.mulf %8, %5 : vector<16x128xf32>
    %cst_6 = arith.constant 4.471500e-02 : f32
    %10 = vector.broadcast %cst_6 : f32 to vector<16x128xf32>
    %11 = arith.mulf %10, %7 : vector<16x128xf32>
    %12 = arith.addf %5, %11 : vector<16x128xf32>
    %cst_7 = arith.constant 0.797884583 : f32
    %13 = vector.broadcast %cst_7 : f32 to vector<16x128xf32>
    %14 = arith.mulf %13, %12 : vector<16x128xf32>
    %15 = math.tanh %14 : vector<16x128xf32>
    %cst_8 = arith.constant 1.000000e+00 : f32
    %16 = vector.broadcast %cst_8 : f32 to vector<16x128xf32>
    %17 = arith.addf %16, %15 : vector<16x128xf32>
    %18 = arith.mulf %9, %17 : vector<16x128xf32>
    %c0_9 = arith.constant 0 : index
    %c0_10 = arith.constant 0 : index
    %19 = vector.load %arg4[%c0_9, %c0_10] : memref<128x32xf32, #tpu.memory_space<vmem>>, vector<128x32xf32>
    %cst_11 = arith.constant dense<0.000000e+00> : vector<16x32xf32>
    %20 = tpu.matmul %18, %19, %cst_11 {dimension_numbers = #tpu.dot_dimension_numbers<[1], [0], [0], [1], [0, 0, 1, 1], [], []>} : vector<16x128xf32>, vector<128x32xf32>, vector<16x32xf32> -> vector<16x32xf32>
    %c0_12 = arith.constant 0 : index
    %c0_13 = arith.constant 0 : index
    %21 = vector.load %arg5[%c0_12, %c0_13] : memref<1x32xf32, #tpu.memory_space<vmem>>, vector<1x32xf32>
    %22 = vector.broadcast %21 : vector<1x32xf32> to vector<16x32xf32>
    %23 = arith.addf %20, %22 : vector<16x32xf32>
    %24 = arith.addf %23, %0 : vector<16x32xf32>
    %cst_14 = arith.constant dense<0.000000e+00> : vector<16xf32>
    %25 = vector.multi_reduction <add>, %24, %cst_14 [1] : vector<16x32xf32> to vector<16xf32>
    %26 = vector.shape_cast %25 : vector<16xf32> to vector<16x1xf32>
    %cst_15 = arith.constant 3.200000e+01 : f32
    %27 = vector.broadcast %cst_15 : f32 to vector<16x1xf32>
    %28 = arith.divf %26, %27 : vector<16x1xf32>
    %29 = vector.broadcast %28 : vector<16x1xf32> to vector<16x32xf32>
    %30 = arith.subf %24, %29 : vector<16x32xf32>
    %31 = arith.mulf %30, %30 : vector<16x32xf32>
    %cst_16 = arith.constant dense<0.000000e+00> : vector<16xf32>
    %32 = vector.multi_reduction <add>, %31, %cst_16 [1] : vector<16x32xf32> to vector<16xf32>
    %33 = vector.shape_cast %32 : vector<16xf32> to vector<16x1xf32>
    %cst_17 = arith.constant 3.200000e+01 : f32
    %34 = vector.broadcast %cst_17 : f32 to vector<16x1xf32>
    %35 = arith.divf %33, %34 : vector<16x1xf32>
    %cst_18 = arith.constant 9.99999974E-6 : f32
    %36 = vector.broadcast %cst_18 : f32 to vector<16x1xf32>
    %37 = arith.addf %35, %36 : vector<16x1xf32>
    %38 = math.rsqrt %37 : vector<16x1xf32>
    %39 = vector.broadcast %38 : vector<16x1xf32> to vector<16x32xf32>
    %40 = arith.mulf %30, %39 : vector<16x32xf32>
    %c0_19 = arith.constant 0 : index
    %c0_20 = arith.constant 0 : index
    %41 = vector.load %arg6[%c0_19, %c0_20] : memref<1x32xf32, #tpu.memory_space<vmem>>, vector<1x32xf32>
    %42 = vector.broadcast %41 : vector<1x32xf32> to vector<16x32xf32>
    %43 = arith.mulf %40, %42 : vector<16x32xf32>
    %c0_21 = arith.constant 0 : index
    %c0_22 = arith.constant 0 : index
    %44 = vector.load %arg7[%c0_21, %c0_22] : memref<1x32xf32, #tpu.memory_space<vmem>>, vector<1x32xf32>
    %45 = vector.broadcast %44 : vector<1x32xf32> to vector<16x32xf32>
    %46 = arith.addf %43, %45 : vector<16x32xf32>
    %c0_23 = arith.constant 0 : index
    %c0_24 = arith.constant 0 : index
    %47 = vector.load %arg8[%c0_23, %c0_24] : memref<16x32xf32, #tpu.memory_space<vmem>>, vector<16x32xf32>
    tpu.vector_store %arg8[%c0_23, %c0_24], %46 {strides = array<i32>} : memref<16x32xf32, #tpu.memory_space<vmem>>, vector<16x32xf32>,
    return
  }
  func.func @transform_0(%arg0: i32) -> (i32, i32) {
    %c0_i32 = arith.constant 0 : i32
    %c0_i32_0 = arith.constant 0 : i32
    return %arg0, %c0_i32 : i32, i32
  }
  func.func @transform_1(%arg0: i32) -> (i32, i32) {
    %c0_i32 = arith.constant 0 : i32
    %c0_i32_0 = arith.constant 0 : i32
    %c0_i32_1 = arith.constant 0 : i32
    return %c0_i32, %c0_i32_0 : i32, i32
  }
  func.func @transform_2(%arg0: i32) -> (i32, i32) {
    %c0_i32 = arith.constant 0 : i32
    %c0_i32_0 = arith.constant 0 : i32
    %c0_i32_1 = arith.constant 0 : i32
    return %c0_i32, %c0_i32_0 : i32, i32
  }
  func.func @transform_3(%arg0: i32) -> (i32, i32) {
    %c0_i32 = arith.constant 0 : i32
    %c0_i32_0 = arith.constant 0 : i32
    %c0_i32_1 = arith.constant 0 : i32
    return %c0_i32, %c0_i32_0 : i32, i32
  }
  func.func @transform_4(%arg0: i32) -> (i32, i32) {
    %c0_i32 = arith.constant 0 : i32
    %c0_i32_0 = arith.constant 0 : i32
    %c0_i32_1 = arith.constant 0 : i32
    return %c0_i32, %c0_i32_0 : i32, i32
  }
  func.func @transform_5(%arg0: i32) -> (i32, i32) {
    %c0_i32 = arith.constant 0 : i32
    %c0_i32_0 = arith.constant 0 : i32
    %c0_i32_1 = arith.constant 0 : i32
    return %c0_i32, %c0_i32_0 : i32, i32
  }
  func.func @transform_6(%arg0: i32) -> (i32, i32) {
    %c0_i32 = arith.constant 0 : i32
    %c0_i32_0 = arith.constant 0 : i32
    %c0_i32_1 = arith.constant 0 : i32
    return %c0_i32, %c0_i32_0 : i32, i32
  }
  func.func @transform_7(%arg0: i32) -> (i32, i32) {
    %c0_i32 = arith.constant 0 : i32
    %c0_i32_0 = arith.constant 0 : i32
    return %arg0, %c0_i32 : i32, i32
  }
}

</mosaic_0001>

<llo_original>
// kernel: tpu_custom_call.1
$region0: #{tpu_custom_call.1}
  #allocation0 [shape = 'u32[]', space=smem, size = 0x4, offset = 0x4, fixed_abs, tag = 'smem constant byte address 0x4 - core index']
  #allocation1 [shape = 'u32[144,128]{1,0:T(1,128)}', space=vmem, size = 0x12000, scoped, tag = 'internal scratch']
  %s0 = inlined_call_operand.vmem [shape: f32[16,32], index: 0, kind: input, shape index: {}]
  %s1 = inlined_call_operand.vmem [shape: f32[32,128], index: 1, kind: input, shape index: {}]
  %s2 = inlined_call_operand.vmem [shape: f32[1,128], index: 2, kind: input, shape index: {}]
  %s3 = inlined_call_operand.vmem [shape: f32[128,32], index: 3, kind: input, shape index: {}]
  %s4 = inlined_call_operand.vmem [shape: f32[1,32], index: 4, kind: input, shape index: {}]
  %s5 = inlined_call_operand.vmem [shape: f32[1,32], index: 5, kind: input, shape index: {}]
  %s6 = inlined_call_operand.vmem [shape: f32[1,32], index: 6, kind: input, shape index: {}]
  %s7 = inlined_call_operand.hbm [shape: f32[16,32], index: 7, kind: output, shape index: {}]
  %s8 = sld [smem:[#allocation0]]
  $region38: #{tpu_custom_call.1} parent=0
    _
  %s10 = ssub.s32 1, %s8
  %s11 = scalar_select 0, %s10, %s8
  $region1: #{tpu_custom_call.1} parent=0
    #allocation2 [shape = 'u8[8192]{0}', space=vmem, size = 0x2000, scoped, tag = 'output window, operand 0, single buffered']
    #allocation3 [shape = 's32[1]{0}', space=sflag, size = 0x4, scoped, tag = 'scoped memory for tpu_custom_call.1']
    %12 = vsyncpa [#allocation3], 0
    // Predicated region
    $region2: #{tpu_custom_call.1} parent=1 // pred_check
      _
    $region3: #{tpu_custom_call.1} parent=1 // pred_check_branch
      %14 = sbr.rel (0) target = $region5
    $region4: #{tpu_custom_call.1} parent=1 // pred_region
      _
    $region5: #{tpu_custom_call.1} parent=1 // pred_fallthru
      _
    // Predicated region
    $region6: #{tpu_custom_call.1} parent=1 // pred_check
      _
    $region7: #{tpu_custom_call.1} parent=1 // pred_check_branch
      %16 = sbr.rel (0) target = $region9
    $region8: #{tpu_custom_call.1} parent=1 // pred_region
      _
    $region9: #{tpu_custom_call.1} parent=1 // pred_fallthru
      _
    // Predicated region
    $region10: #{tpu_custom_call.1} parent=1 // pred_check
      _
    $region11: #{tpu_custom_call.1} parent=1 // pred_check_branch
      %18 = sbr.rel (0) target = $region13
    $region12: #{tpu_custom_call.1} parent=1 // pred_region
      _
    $region13: #{tpu_custom_call.1} parent=1 // pred_fallthru
      _
    // Predicated region
    $region14: #{tpu_custom_call.1} parent=1 // pred_check
      _
    $region15: #{tpu_custom_call.1} parent=1 // pred_check_branch
      %20 = sbr.rel (0) target = $region17
    $region16: #{tpu_custom_call.1} parent=1 // pred_region
      _
    $region17: #{tpu_custom_call.1} parent=1 // pred_fallthru
      _
    // Predicated region
    $region18: #{tpu_custom_call.1} parent=1 // pred_check
      _
    $region19: #{tpu_custom_call.1} parent=1 // pred_check_branch
      %22 = sbr.rel (0) target = $region21
    $region20: #{tpu_custom_call.1} parent=1 // pred_region
      _
    $region21: #{tpu_custom_call.1} parent=1 // pred_fallthru
      _
    // Predicated region
    $region22: #{tpu_custom_call.1} parent=1 // pred_check
      _
    $region23: #{tpu_custom_call.1} parent=1 // pred_check_branch
      %24 = sbr.rel (0) target = $region25
    $region24: #{tpu_custom_call.1} parent=1 // pred_region
      _
    $region25: #{tpu_custom_call.1} parent=1 // pred_fallthru
      _
    // Predicated region
    $region26: #{tpu_custom_call.1} parent=1 // pred_check
      _
    $region27: #{tpu_custom_call.1} parent=1 // pred_check_branch
      %26 = sbr.rel (0) target = $region29
    $region28: #{tpu_custom_call.1} parent=1 // pred_region
      _
    $region29: #{tpu_custom_call.1} parent=1 // pred_fallthru
      _
    %v27 = vld [vmem:[%s0] sm:$0xff]
    %v28 = vld [vmem:[%s0 + $0x8] sm:$0xff]
    %v29 = vld [vmem:[%s1] sm:$0xff]
    %v30 = vld [vmem:[%s1 + $0x8] sm:$0xff]
    %v31 = vld [vmem:[%s1 + $0x10] sm:$0xff]
    %v32 = vld [vmem:[%s1 + $0x18] sm:$0xff]
    %v33 = vld [vmem:[%s2] sm:$0x1]
    %v35 = vlaneseq
    %v36 = vshrl.u32 %v35, 7
    %v37 = vsub.s32 0, %v36
    %v38 = vrot.slane %v33, %v37
    %vm40 = vcmask 261120
    %v42 = vsel %vm40, %v27, 0
    %v45 = vsel %vm40, %v28, 0
    %47 = vmatprep.subr.mxu0 0.0
    %48 = vmatpush1.msra.mxu0 %v29
    %49 = vmatprep.subr.mxu0 0.0
    %50 = vmatpush1.msra.mxu0 %v30
    %51 = vmatprep.subr.mxu0 0.0
    %52 = vmatpush1.msra.mxu0 %v31
    %53 = vmatprep.subr.mxu0 0.0
    %54 = vmatpush1.msra.mxu0 %v32
    %55 = vmatprep.subr.mxu0 0.0
    %56 = vmatpush1.msra.mxu0 0.0
    %57 = vmatprep.subr.mxu0 0.0
    %58 = vmatpush1.msra.mxu0 0.0
    %59 = vmatprep.subr.mxu0 0.0
    %60 = vmatpush1.msra.mxu0 0.0
    %61 = vmatprep.subr.mxu0 0.0
    %62 = vmatpush1.msra.mxu0 0.0
    %63 = vmatprep.subr.mxu0 0.0
    %64 = vmatpush1.msra.mxu0 0.0
    %65 = vmatprep.subr.mxu0 0.0
    %66 = vmatpush1.msra.mxu0 0.0
    %67 = vmatprep.subr.mxu0 0.0
    %68 = vmatpush1.msra.mxu0 0.0
    %69 = vmatprep.subr.mxu0 0.0
    %70 = vmatpush1.msra.mxu0 0.0
    %71 = vmatprep.subr.mxu0 0.0
    %72 = vmatpush1.msra.mxu0 0.0
    %73 = vmatprep.subr.mxu0 0.0
    %74 = vmatpush1.msra.mxu0 0.0
    %75 = vmatprep.subr.mxu0 0.0
    %76 = vmatpush1.msra.mxu0 0.0
    %77 = vmatprep.subr.mxu0 0.0
    %78 = vmatpush1.msra.mxu0 0.0
    %79 = vmatprep.subr.mxu0 0.0
    %80 = vmatpush1.msra.mxu0 0.0
    %81 = vmatprep.subr.mxu0 0.0
    %82 = vmatpush1.msra.mxu0 0.0
    %83 = vmatprep.subr.mxu0 0.0
    %84 = vmatpush1.msra.mxu0 0.0
    %85 = vmatprep.subr.mxu0 0.0
    %86 = vmatpush1.msra.mxu0 0.0
    %87 = vmatprep.subr.mxu0 0.0
    %88 = vmatpush1.msra.mxu0 0.0
    %89 = vmatprep.subr.mxu0 0.0
    %90 = vmatpush1.msra.mxu0 0.0
    %91 = vmatprep.subr.mxu0 0.0
    %92 = vmatpush1.msra.mxu0 0.0
    %93 = vmatprep.subr.mxu0 0.0
    %94 = vmatpush1.msra.mxu0 0.0
    %95 = vmatprep.subr.mxu0 0.0
    %96 = vmatpush1.msra.mxu0 0.0
    %97 = vmatprep.subr.mxu0 0.0
    %98 = vmatpush1.msra.mxu0 0.0
    %99 = vmatprep.subr.mxu0 0.0
    %100 = vmatpush1.msra.mxu0 0.0
    %101 = vmatprep.subr.mxu0 0.0
    %102 = vmatpush1.msra.mxu0 0.0
    %103 = vmatprep.subr.mxu0 0.0
    %104 = vmatpush1.msra.mxu0 0.0
    %105 = vmatprep.subr.mxu0 0.0
    %106 = vmatpush1.msra.mxu0 0.0
    %107 = vmatprep.subr.mxu0 0.0
    %108 = vmatpush1.msra.mxu0 0.0
    %109 = vmatprep.subr.mxu0 0.0
    %110 = vmatpush1.msra.mxu0 0.0
    %111 = vmatprep.mubr.f32.mxu0 0.0
    %112 = vmatmul.mubr.f32.gmra.mrb[0].mxu0 %v42
    %v113 = vpop.f32.mrb[0].mxu0
    %v114 = vadd.f32 %v38, %v113
    %v115 = vpop.f32.mrb[0].mxu0
    %116 = vmatprep.mubr.f32.mxu0 0.0
    %117 = vmatmul.mubr.f32.gmra.mrb[0].mxu0 %v45
    %v118 = vpop.f32.mrb[0].mxu0
    %v119 = vadd.f32 %v38, %v118
    %v120 = vpop.f32.mrb[0].mxu0
    %121 = vdwg.mxu0
    %v122 = vmul.f32 %v114, %v114
    %v123 = vmul.f32 %v119, %v119
    %v124 = vmul.f32 %v122, %v114
    %v125 = vmul.f32 %v123, %v119
    %v126 = vmul.f32 %v114, 0.5
    %v127 = vmul.f32 %v119, 0.5
    %v128 = vmul.f32 %v124, 0.044715
    %v129 = vmul.f32 %v125, 0.044715
    %v130 = vadd.f32 %v114, %v128
    %v131 = vadd.f32 %v119, %v129
    %v132 = vmul.f32 %v130, 0.7978846
    %v133 = vmul.f32 %v131, 0.7978846
    %v134 = vtanh.pop %v132
    %v135 = vtanh.pop %v133
    %v136 = vadd.f32 %v134, 1.0
    %v137 = vadd.f32 %v135, 1.0
    %v138 = vmul.f32 %v126, %v136
    %v139 = vmul.f32 %v127, %v137
    %v140 = vld [vmem:[%s3] sm:$0xff]
    %v141 = vld [vmem:[%s3 + $0x8] sm:$0xff]
    %v142 = vld [vmem:[%s3 + $0x10] sm:$0xff]
    %v143 = vld [vmem:[%s3 + $0x18] sm:$0xff]
    %v144 = vld [vmem:[%s3 + $0x20] sm:$0xff]
    %v145 = vld [vmem:[%s3 + $0x28] sm:$0xff]
    %v146 = vld [vmem:[%s3 + $0x30] sm:$0xff]
    %v147 = vld [vmem:[%s3 + $0x38] sm:$0xff]
    %v148 = vld [vmem:[%s3 + $0x40] sm:$0xff]
    %v149 = vld [vmem:[%s3 + $0x48] sm:$0xff]
    %v150 = vld [vmem:[%s3 + $0x50] sm:$0xff]
    %v151 = vld [vmem:[%s3 + $0x58] sm:$0xff]
    %v152 = vld [vmem:[%s3 + $0x60] sm:$0xff]
    %v153 = vld [vmem:[%s3 + $0x68] sm:$0xff]
    %v154 = vld [vmem:[%s3 + $0x70] sm:$0xff]
    %v155 = vld [vmem:[%s3 + $0x78] sm:$0xff]
    %v156 = vld [vmem:[%s4] sm:$0x1]
    %v158 = vlaneseq
    %v159 = vshrl.u32 %v158, 7
    %v160 = vsub.s32 0, %v159
    %v161 = vrot.slane %v156, %v160
    %163 = vmatprep.subr.mxu0 0.0
    %164 = vmatpush1.msra.mxu0 %v140
    %165 = vmatprep.subr.mxu0 0.0
    %166 = vmatpush1.msra.mxu0 %v141
    %167 = vmatprep.subr.mxu0 0.0
    %168 = vmatpush1.msra.mxu0 %v142
    %169 = vmatprep.subr.mxu0 0.0
    %170 = vmatpush1.msra.mxu0 %v143
    %171 = vmatprep.subr.mxu0 0.0
    %172 = vmatpush1.msra.mxu0 %v144
    %173 = vmatprep.subr.mxu0 0.0
    %174 = vmatpush1.msra.mxu0 %v145
    %175 = vmatprep.subr.mxu0 0.0
    %176 = vmatpush1.msra.mxu0 %v146
    %177 = vmatprep.subr.mxu0 0.0
    %178 = vmatpush1.msra.mxu0 %v147
    %179 = vmatprep.subr.mxu0 0.0
    %180 = vmatpush1.msra.mxu0 %v148
    %181 = vmatprep.subr.mxu0 0.0
    %182 = vmatpush1.msra.mxu0 %v149
    %183 = vmatprep.subr.mxu0 0.0
    %184 = vmatpush1.msra.mxu0 %v150
    %185 = vmatprep.subr.mxu0 0.0
    %186 = vmatpush1.msra.mxu0 %v151
    %187 = vmatprep.subr.mxu0 0.0
    %188 = vmatpush1.msra.mxu0 %v152
    %189 = vmatprep.subr.mxu0 0.0
    %190 = vmatpush1.msra.mxu0 %v153
    %191 = vmatprep.subr.mxu0 0.0
    %192 = vmatpush1.msra.mxu0 %v154
    %193 = vmatprep.subr.mxu0 0.0
    %194 = vmatpush1.msra.mxu0 %v155
    %195 = vmatprep.subr.mxu0 0.0
    %196 = vmatpush1.msra.mxu0 0.0
    %197 = vmatprep.subr.mxu0 0.0
    %198 = vmatpush1.msra.mxu0 0.0
    %199 = vmatprep.subr.mxu0 0.0
    %200 = vmatpush1.msra.mxu0 0.0
    %201 = vmatprep.subr.mxu0 0.0
    %202 = vmatpush1.msra.mxu0 0.0
    %203 = vmatprep.subr.mxu0 0.0
    %204 = vmatpush1.msra.mxu0 0.0
    %205 = vmatprep.subr.mxu0 0.0
    %206 = vmatpush1.msra.mxu0 0.0
    %207 = vmatprep.subr.mxu0 0.0
    %208 = vmatpush1.msra.mxu0 0.0
    %209 = vmatprep.subr.mxu0 0.0
    %210 = vmatpush1.msra.mxu0 0.0
    %211 = vmatprep.subr.mxu0 0.0
    %212 = vmatpush1.msra.mxu0 0.0
    %213 = vmatprep.subr.mxu0 0.0
    %214 = vmatpush1.msra.mxu0 0.0
    %215 = vmatprep.subr.mxu0 0.0
    %216 = vmatpush1.msra.mxu0 0.0
    %217 = vmatprep.subr.mxu0 0.0
    %218 = vmatpush1.msra.mxu0 0.0
    %219 = vmatprep.subr.mxu0 0.0
    %220 = vmatpush1.msra.mxu0 0.0
    %221 = vmatprep.subr.mxu0 0.0
    %222 = vmatpush1.msra.mxu0 0.0
    %223 = vmatprep.subr.mxu0 0.0
    %224 = vmatpush1.msra.mxu0 0.0
    %225 = vmatprep.subr.mxu0 0.0
    %226 = vmatpush1.msra.mxu0 0.0
    %227 = vmatprep.mubr.f32.mxu0 0.0
    %228 = vmatmul.mubr.f32.gmra.mrb[0].mxu0 %v138
    %v229 = vpop.f32.mrb[0].mxu0
    %v230 = vadd.f32 %v161, %v229
    %v231 = vpop.f32.mrb[0].mxu0
    %232 = vmatprep.mubr.f32.mxu0 0.0
    %233 = vmatmul.mubr.f32.gmra.mrb[0].mxu0 %v139
    %v234 = vpop.f32.mrb[0].mxu0
    %v235 = vadd.f32 %v161, %v234
    %v236 = vpop.f32.mrb[0].mxu0
    %237 = vdwg.mxu0
    %v238 = vadd.f32 %v230, %v27
    %v239 = vadd.f32 %v235, %v28
    %v240 = vsel %vm40, %v238, 0.0
    %241 = vadd.xlane.f32.xlu0 %v240
    %v242 = vpop.xlane.xlu0 %241
    %v243 = vsel %vm40, %v239, 0.0
    %244 = vadd.xlane.f32.xlu0 %v243
    %v245 = vpop.xlane.xlu0 %244
    %v246 = vrcp.pop 32.0
    %v247 = vmul.f32 %v242, %v246
    %v248 = vmul.f32 %v245, %v246
    %v249 = vsub.f32 %v238, %v247
    %v250 = vsub.f32 %v239, %v248
    %v251 = vmul.f32 %v249, %v249
    %v252 = vmul.f32 %v250, %v250
    %v253 = vsel %vm40, %v251, 0.0
    %254 = vadd.xlane.f32.xlu0 %v253
    %v255 = vpop.xlane.xlu0 %254
    %v256 = vsel %vm40, %v252, 0.0
    %257 = vadd.xlane.f32.xlu0 %v256
    %v258 = vpop.xlane.xlu0 %257
    %v259 = vmul.f32 %v255, %v246
    %v260 = vmul.f32 %v258, %v246
    %v261 = vadd.f32 %v259, 1e-05
    %v262 = vadd.f32 %v260, 1e-05
    %v263 = vrsqrt.pop %v261
    %v264 = vrsqrt.pop %v262
    %v265 = vmul.f32 %v249, %v263
    %v266 = vmul.f32 %v250, %v264
    %v267 = vld [vmem:[%s5] sm:$0x1]
    %v269 = vlaneseq
    %v270 = vshrl.u32 %v269, 7
    %v271 = vsub.s32 0, %v270
    %v272 = vrot.slane %v267, %v271
    %v274 = vmul.f32 %v265, %v272
    %v275 = vmul.f32 %v266, %v272
    %v276 = vld [vmem:[%s6] sm:$0x1]
    %v278 = vlaneseq
    %v279 = vshrl.u32 %v278, 7
    %v280 = vsub.s32 0, %v279
    %v281 = vrot.slane %v276, %v280
    %v283 = vadd.f32 %v274, %v281
    %v284 = vadd.f32 %v275, %v281
    %285 = vst.msk [vmem:[#allocation2] sm:$0xff] %vm40, %v283
    %286 = vst.msk [vmem:[#allocation2 + $0x8] sm:$0xff] %vm40, %v284
    // Predicated region
    $region30: #{tpu_custom_call.1} parent=1 // pred_check
      _
    $region31: #{tpu_custom_call.1} parent=1 // pred_check_branch
      %288 = sbr.rel (0) target = $region33
    $region32: #{tpu_custom_call.1} parent=1 // pred_region
      %s290 = ssub.s32 256, 256
      %291 = vsyncadd [#allocation3], %s290
      %s292 = sshll.u32 [#allocation2], 4
      %s293 = int_to_ptr.vmem [resolvable:$true] %s292
      %298 = dma.vmem_to_hbm [thread:$0]  %s293, 256, %s7, [#allocation3], 128, 128, 8
    $region33: #{tpu_custom_call.1} parent=1 // pred_fallthru
      _
    // Predicated region
    $region34: #{tpu_custom_call.1} parent=1 // pred_check
      _
    $region35: #{tpu_custom_call.1} parent=1 // pred_check_branch
      %300 = sbr.rel (0) target = $region37
    $region36: #{tpu_custom_call.1} parent=1 // pred_region
      %301 = dma.done [#allocation3], 256
    $region37: #{tpu_custom_call.1} parent=1 // pred_fallthru
      _
    %302 = vsyncpa [#allocation3], 1

</llo_original>
